<compile_context>
chip_gen: v7x
topology: tpu7x:2x2x1
jax: 0.10.0
libtpu: 0.0.40
codegen_flags: <defaults>
</compile_context>

<pallas_src>
import jax
import jax.numpy as jnp
import numpy as np
from jax.experimental import pallas as pl
from jax.experimental.pallas import tpu as pltpu

LATENT = 4                       # latent_features
X_DIM, Y_DIM, E_DIM = 10, 2, 3
HID = 6
DEC_OUT = 10                     # prod(input_shape), input_shape = (10,)
PX_LOG_SIGMA = float(np.log(np.sqrt(0.01)))   # constant log_sigma of p(x|z)

# Packed weight slab: per-layer blocks [M, K+1] (W[out,in] in cols 0:K, bias in col K),
# at 8-aligned row offsets.  Block shape == full array shape, so it is exempt from (8,128).
W_ROWS, W_COLS = 56, 16
R_EW1, R_EW2 = 0, 8      # encoder 15->6 (rows 0:6),  6->8  (rows 8:16)
R_PW1, R_PW2 = 16, 24    # prior   5->6  (rows 16:22), 6->8 (rows 24:32)
R_DW1, R_DW2 = 32, 40    # decoder 4->6  (rows 32:38), 6->10 (rows 40:50)


def _fma_linear(wb, rows):
    """One Linear in the transposed layout as K VPU broadcast-FMA passes (no MXU).

    wb:   [M, >=K+1] weight block; cols 0:K hold W[out,in], col K holds the bias.
    rows: list of K activation rows, each [1, TB].
    Returns W @ act + b as an [M, TB] float32 array.
    """
    k = len(rows)
    out = wb[:, 0:1] * rows[0]                 # [M,1] * [1,TB] -> [M,TB]
    for j in range(1, k):
        out = out + wb[:, j:j + 1] * rows[j]
    return out + wb[:, k:k + 1]                # + bias column (lane-broadcast)


def ivae_kernel(x_ref, y_ref, e_ref, eps_ref, w_ref,
                qzmu_ref, qzls_ref, pzmu_ref, pzls_ref, z_ref, px_ref):
    def ref_rows(ref, n):
        return [ref[j:j + 1, :] for j in range(n)]

    def val_rows(v):
        return [v[j:j + 1, :] for j in range(v.shape[0])]

    x_rows = ref_rows(x_ref, X_DIM)
    y_rows = ref_rows(y_ref, Y_DIM)
    e_rows = ref_rows(e_ref, E_DIM)

    # encoder q(z|x,y,e): 15 -> 6 -> 8   (no feature concat needed: just iterate the rows)
    h1 = jnp.maximum(_fma_linear(w_ref[R_EW1:R_EW1 + HID, :],
                                 x_rows + y_rows + e_rows), 0.0)              # [6, TB]
    enc = _fma_linear(w_ref[R_EW2:R_EW2 + 2 * LATENT, :], val_rows(h1))       # [8, TB]
    qz_mu = enc[0:LATENT, :]
    qz_ls = enc[LATENT:2 * LATENT, :]

    # prior p(z|y,e): 5 -> 6 -> 8
    g1 = jnp.maximum(_fma_linear(w_ref[R_PW1:R_PW1 + HID, :], y_rows + e_rows), 0.0)
    pri = _fma_linear(w_ref[R_PW2:R_PW2 + 2 * LATENT, :], val_rows(g1))       # [8, TB]

    # reparameterized sample z = mu + exp(log_sigma) * eps
    z = qz_mu + jnp.exp(qz_ls) * eps_ref[...]                                 # [4, TB]

    # decoder p(x|z): 4 -> 6 -> 10
    d1 = jnp.maximum(_fma_linear(w_ref[R_DW1:R_DW1 + HID, :], val_rows(z)), 0.0)
    px = _fma_linear(w_ref[R_DW2:R_DW2 + DEC_OUT, :], val_rows(d1))           # [10, TB]

    # six direct lane-dense stores: no lane-axis concatenation, no zero-pad lanes
    qzmu_ref[...] = qz_mu
    qzls_ref[...] = qz_ls
    pzmu_ref[...] = pri[0:LATENT, :]
    pzls_ref[...] = pri[LATENT:2 * LATENT, :]
    z_ref[...] = z
    px_ref[...] = px


def pack_params(params):
    """Pack the 12 Linear weights/biases into one [56, 16] f32 slab for transposed compute."""
    (ew1, eb1, ew2, eb2, dw1, db1, dw2, db2, pw1, pb1, pw2, pb2) = params
    W = jnp.zeros((W_ROWS, W_COLS), jnp.float32)

    def put(W, r0, w, b):
        # w: [fan_in, fan_out] (as used in `act @ w + b`); stored as W[out,in] plus bias col.
        k, m = w.shape
        W = W.at[r0:r0 + m, 0:k].set(w.T.astype(jnp.float32))
        W = W.at[r0:r0 + m, k:k + 1].set(b.reshape(m, 1).astype(jnp.float32))
        return W

    W = put(W, R_EW1, ew1, eb1)   # encoder 15 -> 6
    W = put(W, R_EW2, ew2, eb2)   # encoder  6 -> 8
    W = put(W, R_PW1, pw1, pb1)   # prior    5 -> 6
    W = put(W, R_PW2, pw2, pb2)   # prior    6 -> 8
    W = put(W, R_DW1, dw1, db1)   # decoder  4 -> 6
    W = put(W, R_DW2, dw2, db2)   # decoder  6 -> 10
    return W


def _pick_tile(B, tb_max):
    """Batch tile TB (multiple of 128), >= 2 grid steps when B > 128, minimal padding."""
    tb_max = max(128, (int(tb_max) // 128) * 128)
    tb0 = min(tb_max, max(128, 128 * pl.cdiv(pl.cdiv(B, 2), 128)))
    n_tiles = pl.cdiv(B, tb0)
    tb = max(128, 128 * pl.cdiv(pl.cdiv(B, n_tiles), 128))   # rebalance to minimize padding
    n_tiles = pl.cdiv(B, tb)
    return tb, n_tiles, tb * n_tiles


def ivae_forward(x, y, e, eps, params, tb=8192):
    """Pallas implementation of iVAE_synth.forward (distributions as (mu, log_sigma) tuples)."""
    B = x.shape[0]
    w_packed = pack_params(params)
    TB, n_tiles, B_pad = _pick_tile(B, tb)

    def prep(a):
        # [B, F] -> [F, B_pad]: layout plumbing (batch on the 128-lane axis).
        a = a.astype(jnp.float32).T
        if B_pad != B:
            a = jnp.pad(a, ((0, 0), (0, B_pad - B)))
        return a

    xT, yT, eT, epsT = prep(x), prep(y), prep(e), prep(eps)

    def feat_spec(f):
        return pl.BlockSpec((f, TB), lambda i: (0, i))

    outs = pl.pallas_call(
        ivae_kernel,
        out_shape=(
            jax.ShapeDtypeStruct((LATENT, B_pad), jnp.float32),    # qz_mu
            jax.ShapeDtypeStruct((LATENT, B_pad), jnp.float32),    # qz_log_sigma
            jax.ShapeDtypeStruct((LATENT, B_pad), jnp.float32),    # pz_mu
            jax.ShapeDtypeStruct((LATENT, B_pad), jnp.float32),    # pz_log_sigma
            jax.ShapeDtypeStruct((LATENT, B_pad), jnp.float32),    # z
            jax.ShapeDtypeStruct((DEC_OUT, B_pad), jnp.float32),   # px_mu
        ),
        grid=(n_tiles,),
        in_specs=[
            feat_spec(X_DIM),                                      # x^T   : pipelined
            feat_spec(Y_DIM),                                      # y^T
            feat_spec(E_DIM),                                      # e^T
            feat_spec(LATENT),                                     # eps^T
            pl.BlockSpec((W_ROWS, W_COLS), lambda i: (0, 0)),      # weights: resident
        ],
        out_specs=(
            feat_spec(LATENT), feat_spec(LATENT), feat_spec(LATENT),
            feat_spec(LATENT), feat_spec(LATENT), feat_spec(DEC_OUT),
        ),
        compiler_params=pltpu.CompilerParams(
            dimension_semantics=("parallel",)),
    )(xT, yT, eT, epsT, w_packed)

    def unpack(a):                 # [F, B_pad] -> [B, F]
        return a[:, :B].T

    qz_mu, qz_ls = unpack(outs[0]), unpack(outs[1])
    pz_mu, pz_ls = unpack(outs[2]), unpack(outs[3])
    z = unpack(outs[4])
    px_mu = unpack(outs[5])
    # p(x|z) has constant log_sigma = log(sqrt(0.01)) per the observation model.
    px_ls = jnp.full_like(px_mu, PX_LOG_SIGMA)
    return {"px": (px_mu, px_ls), "pz": (pz_mu, pz_ls), "qz": (qz_mu, qz_ls), "z": z}


def init_params(key):
    """Deterministic PyTorch-Linear-style init (uniform +/- 1/sqrt(fan_in))."""
    keys = jax.random.split(key, 12)

    def lin(kw, kb, fan_in, fan_out):
        bound = 1.0 / np.sqrt(fan_in)
        w = jax.random.uniform(kw, (fan_in, fan_out), jnp.float32, -bound, bound)
        b = jax.random.uniform(kb, (1, fan_out), jnp.float32, -bound, bound)
        return w, b

    ew1, eb1 = lin(keys[0], keys[1], X_DIM + Y_DIM + E_DIM, HID)   # 15 -> 6
    ew2, eb2 = lin(keys[2], keys[3], HID, 2 * LATENT)              # 6  -> 8
    dw1, db1 = lin(keys[4], keys[5], LATENT, HID)                  # 4  -> 6
    dw2, db2 = lin(keys[6], keys[7], HID, DEC_OUT)                 # 6  -> 10
    pw1, pb1 = lin(keys[8], keys[9], Y_DIM + E_DIM, HID)           # 5  -> 6
    pw2, pb2 = lin(keys[10], keys[11], HID, 2 * LATENT)            # 6  -> 8
    return (ew1, eb1, ew2, eb2, dw1, db1, dw2, db2, pw1, pb1, pw2, pb2)


def ivae_forward_ref(x, y, e, eps, params):
    """Pure-JAX reference for correctness checking."""
    (ew1, eb1, ew2, eb2, dw1, db1, dw2, db2, pw1, pb1, pw2, pb2) = params
    xye = jnp.concatenate([x, y, e], axis=1)
    ye = jnp.concatenate([y, e], axis=1)
    enc = jnp.maximum(xye @ ew1 + eb1, 0.0) @ ew2 + eb2
    qz_mu, qz_ls = enc[:, :LATENT], enc[:, LATENT:]
    z = qz_mu + jnp.exp(qz_ls) * eps
    px_mu = jnp.maximum(z @ dw1 + db1, 0.0) @ dw2 + db2
    pri = jnp.maximum(ye @ pw1 + pb1, 0.0) @ pw2 + pb2
    return qz_mu, qz_ls, z, px_mu, pri[:, :LATENT], pri[:, LATENT:]


if __name__ == "__main__":
    key = jax.random.PRNGKey(0)
    kp, kd = jax.random.split(key)
    params = init_params(kp)

    # B=13 exercises the single padded tile; B=300 exercises 2 grid tiles + lane padding.
    for B in (13, 300):
        kx, ky, ke, keps, kd = jax.random.split(kd, 5)
        x = jax.random.normal(kx, (B, X_DIM), jnp.float32)
        y = jax.random.normal(ky, (B, Y_DIM), jnp.float32)
        e = jax.random.normal(ke, (B, E_DIM), jnp.float32)
        # TODO(synk): torch's internal RNG for qz.rsample() is not reproducible in JAX;
        # the standard-normal noise eps is generated here and passed in explicitly.
        eps = jax.random.normal(keps, (B, LATENT), jnp.float32)

        out = ivae_forward(x, y, e, eps, params)
        jax.block_until_ready(out)

        qz_mu, qz_ls, z, px_mu, pz_mu, pz_ls = ivae_forward_ref(x, y, e, eps, params)
        ref = (qz_mu, qz_ls, pz_mu, pz_ls, z, px_mu)
        got = (out["qz"][0], out["qz"][1], out["pz"][0], out["pz"][1],
               out["z"], out["px"][0])
        for g, r in zip(got, ref):
            np.testing.assert_allclose(np.asarray(g), np.asarray(r),
                                       rtol=1e-5, atol=1e-5)

    print("KERNEL_OK")
</pallas_src>

<mosaic_0001>
module attributes {stable_mosaic.version = 11 : i64} {
  func.func @ivae_kernel(%arg0: i32, %arg1: memref<10x128xf32, #tpu.memory_space<vmem>>, %arg2: memref<2x128xf32, #tpu.memory_space<vmem>>, %arg3: memref<3x128xf32, #tpu.memory_space<vmem>>, %arg4: memref<4x128xf32, #tpu.memory_space<vmem>>, %arg5: memref<56x16xf32, #tpu.memory_space<vmem>>, %arg6: memref<4x128xf32, #tpu.memory_space<vmem>>, %arg7: memref<4x128xf32, #tpu.memory_space<vmem>>, %arg8: memref<4x128xf32, #tpu.memory_space<vmem>>, %arg9: memref<4x128xf32, #tpu.memory_space<vmem>>, %arg10: memref<4x128xf32, #tpu.memory_space<vmem>>, %arg11: memref<10x128xf32, #tpu.memory_space<vmem>>) attributes {dimension_semantics = [#tpu.dimension_semantics<parallel>], iteration_bounds = array<i64: 1>, scalar_prefetch = 0 : i64, scratch_operands = 0 : i64, tpu.core_type = #tpu.core_type<tc>, window_params = [{transform_indices = @transform_0, window_bounds = array<i64: 10, 128>}, {transform_indices = @transform_1, window_bounds = array<i64: 2, 128>}, {transform_indices = @transform_2, window_bounds = array<i64: 3, 128>}, {transform_indices = @transform_3, window_bounds = array<i64: 4, 128>}, {pipeline_mode = #tpu.pipeline_mode<synchronous>, transform_indices = @transform_4, window_bounds = array<i64: 56, 16>}, {transform_indices = @transform_5, window_bounds = array<i64: 4, 128>}, {transform_indices = @transform_6, window_bounds = array<i64: 4, 128>}, {transform_indices = @transform_7, window_bounds = array<i64: 4, 128>}, {transform_indices = @transform_8, window_bounds = array<i64: 4, 128>}, {transform_indices = @transform_9, window_bounds = array<i64: 4, 128>}, {transform_indices = @transform_10, window_bounds = array<i64: 10, 128>}]} {
    %c0 = arith.constant 0 : index
    %c0_0 = arith.constant 0 : index
    %0 = vector.load %arg1[%c0, %c0_0] : memref<10x128xf32, #tpu.memory_space<vmem>>, vector<1x128xf32>
    %c1 = arith.constant 1 : index
    %c0_1 = arith.constant 0 : index
    %1 = vector.load %arg1[%c1, %c0_1] : memref<10x128xf32, #tpu.memory_space<vmem>>, vector<1x128xf32>
    %c2 = arith.constant 2 : index
    %c0_2 = arith.constant 0 : index
    %2 = vector.load %arg1[%c2, %c0_2] : memref<10x128xf32, #tpu.memory_space<vmem>>, vector<1x128xf32>
    %c3 = arith.constant 3 : index
    %c0_3 = arith.constant 0 : index
    %3 = vector.load %arg1[%c3, %c0_3] : memref<10x128xf32, #tpu.memory_space<vmem>>, vector<1x128xf32>
    %c4 = arith.constant 4 : index
    %c0_4 = arith.constant 0 : index
    %4 = vector.load %arg1[%c4, %c0_4] : memref<10x128xf32, #tpu.memory_space<vmem>>, vector<1x128xf32>
    %c5 = arith.constant 5 : index
    %c0_5 = arith.constant 0 : index
    %5 = vector.load %arg1[%c5, %c0_5] : memref<10x128xf32, #tpu.memory_space<vmem>>, vector<1x128xf32>
    %c6 = arith.constant 6 : index
    %c0_6 = arith.constant 0 : index
    %6 = vector.load %arg1[%c6, %c0_6] : memref<10x128xf32, #tpu.memory_space<vmem>>, vector<1x128xf32>
    %c7 = arith.constant 7 : index
    %c0_7 = arith.constant 0 : index
    %7 = vector.load %arg1[%c7, %c0_7] : memref<10x128xf32, #tpu.memory_space<vmem>>, vector<1x128xf32>
    %c8 = arith.constant 8 : index
    %c0_8 = arith.constant 0 : index
    %8 = vector.load %arg1[%c8, %c0_8] : memref<10x128xf32, #tpu.memory_space<vmem>>, vector<1x128xf32>
    %c9 = arith.constant 9 : index
    %c0_9 = arith.constant 0 : index
    %9 = vector.load %arg1[%c9, %c0_9] : memref<10x128xf32, #tpu.memory_space<vmem>>, vector<1x128xf32>
    %c0_10 = arith.constant 0 : index
    %c0_11 = arith.constant 0 : index
    %10 = vector.load %arg2[%c0_10, %c0_11] : memref<2x128xf32, #tpu.memory_space<vmem>>, vector<1x128xf32>
    %c1_12 = arith.constant 1 : index
    %c0_13 = arith.constant 0 : index
    %11 = vector.load %arg2[%c1_12, %c0_13] : memref<2x128xf32, #tpu.memory_space<vmem>>, vector<1x128xf32>
    %c0_14 = arith.constant 0 : index
    %c0_15 = arith.constant 0 : index
    %12 = vector.load %arg3[%c0_14, %c0_15] : memref<3x128xf32, #tpu.memory_space<vmem>>, vector<1x128xf32>
    %c1_16 = arith.constant 1 : index
    %c0_17 = arith.constant 0 : index
    %13 = vector.load %arg3[%c1_16, %c0_17] : memref<3x128xf32, #tpu.memory_space<vmem>>, vector<1x128xf32>
    %c2_18 = arith.constant 2 : index
    %c0_19 = arith.constant 0 : index
    %14 = vector.load %arg3[%c2_18, %c0_19] : memref<3x128xf32, #tpu.memory_space<vmem>>, vector<1x128xf32>
    %c0_20 = arith.constant 0 : index
    %c0_21 = arith.constant 0 : index
    %15 = vector.load %arg5[%c0_20, %c0_21] : memref<56x16xf32, #tpu.memory_space<vmem>>, vector<6x16xf32>
    %16 = vector.extract_strided_slice %15 {offsets = [0, 0], sizes = [6, 1], strides = [1, 1]} : vector<6x16xf32> to vector<6x1xf32>
    %17 = vector.broadcast %16 : vector<6x1xf32> to vector<6x128xf32>
    %18 = vector.broadcast %0 : vector<1x128xf32> to vector<6x128xf32>
    %19 = arith.mulf %17, %18 : vector<6x128xf32>
    %20 = vector.extract_strided_slice %15 {offsets = [0, 1], sizes = [6, 1], strides = [1, 1]} : vector<6x16xf32> to vector<6x1xf32>
    %21 = vector.broadcast %20 : vector<6x1xf32> to vector<6x128xf32>
    %22 = vector.broadcast %1 : vector<1x128xf32> to vector<6x128xf32>
    %23 = arith.mulf %21, %22 : vector<6x128xf32>
    %24 = arith.addf %19, %23 : vector<6x128xf32>
    %25 = vector.extract_strided_slice %15 {offsets = [0, 2], sizes = [6, 1], strides = [1, 1]} : vector<6x16xf32> to vector<6x1xf32>
    %26 = vector.broadcast %25 : vector<6x1xf32> to vector<6x128xf32>
    %27 = vector.broadcast %2 : vector<1x128xf32> to vector<6x128xf32>
    %28 = arith.mulf %26, %27 : vector<6x128xf32>
    %29 = arith.addf %24, %28 : vector<6x128xf32>
    %30 = vector.extract_strided_slice %15 {offsets = [0, 3], sizes = [6, 1], strides = [1, 1]} : vector<6x16xf32> to vector<6x1xf32>
    %31 = vector.broadcast %30 : vector<6x1xf32> to vector<6x128xf32>
    %32 = vector.broadcast %3 : vector<1x128xf32> to vector<6x128xf32>
    %33 = arith.mulf %31, %32 : vector<6x128xf32>
    %34 = arith.addf %29, %33 : vector<6x128xf32>
    %35 = vector.extract_strided_slice %15 {offsets = [0, 4], sizes = [6, 1], strides = [1, 1]} : vector<6x16xf32> to vector<6x1xf32>
    %36 = vector.broadcast %35 : vector<6x1xf32> to vector<6x128xf32>
    %37 = vector.broadcast %4 : vector<1x128xf32> to vector<6x128xf32>
    %38 = arith.mulf %36, %37 : vector<6x128xf32>
    %39 = arith.addf %34, %38 : vector<6x128xf32>
    %40 = vector.extract_strided_slice %15 {offsets = [0, 5], sizes = [6, 1], strides = [1, 1]} : vector<6x16xf32> to vector<6x1xf32>
    %41 = vector.broadcast %40 : vector<6x1xf32> to vector<6x128xf32>
    %42 = vector.broadcast %5 : vector<1x128xf32> to vector<6x128xf32>
    %43 = arith.mulf %41, %42 : vector<6x128xf32>
    %44 = arith.addf %39, %43 : vector<6x128xf32>
    %45 = vector.extract_strided_slice %15 {offsets = [0, 6], sizes = [6, 1], strides = [1, 1]} : vector<6x16xf32> to vector<6x1xf32>
    %46 = vector.broadcast %45 : vector<6x1xf32> to vector<6x128xf32>
    %47 = vector.broadcast %6 : vector<1x128xf32> to vector<6x128xf32>
    %48 = arith.mulf %46, %47 : vector<6x128xf32>
    %49 = arith.addf %44, %48 : vector<6x128xf32>
    %50 = vector.extract_strided_slice %15 {offsets = [0, 7], sizes = [6, 1], strides = [1, 1]} : vector<6x16xf32> to vector<6x1xf32>
    %51 = vector.broadcast %50 : vector<6x1xf32> to vector<6x128xf32>
    %52 = vector.broadcast %7 : vector<1x128xf32> to vector<6x128xf32>
    %53 = arith.mulf %51, %52 : vector<6x128xf32>
    %54 = arith.addf %49, %53 : vector<6x128xf32>
    %55 = vector.extract_strided_slice %15 {offsets = [0, 8], sizes = [6, 1], strides = [1, 1]} : vector<6x16xf32> to vector<6x1xf32>
    %56 = vector.broadcast %55 : vector<6x1xf32> to vector<6x128xf32>
    %57 = vector.broadcast %8 : vector<1x128xf32> to vector<6x128xf32>
    %58 = arith.mulf %56, %57 : vector<6x128xf32>
    %59 = arith.addf %54, %58 : vector<6x128xf32>
    %60 = vector.extract_strided_slice %15 {offsets = [0, 9], sizes = [6, 1], strides = [1, 1]} : vector<6x16xf32> to vector<6x1xf32>
    %61 = vector.broadcast %60 : vector<6x1xf32> to vector<6x128xf32>
    %62 = vector.broadcast %9 : vector<1x128xf32> to vector<6x128xf32>
    %63 = arith.mulf %61, %62 : vector<6x128xf32>
    %64 = arith.addf %59, %63 : vector<6x128xf32>
    %65 = vector.extract_strided_slice %15 {offsets = [0, 10], sizes = [6, 1], strides = [1, 1]} : vector<6x16xf32> to vector<6x1xf32>
    %66 = vector.broadcast %65 : vector<6x1xf32> to vector<6x128xf32>
    %67 = vector.broadcast %10 : vector<1x128xf32> to vector<6x128xf32>
    %68 = arith.mulf %66, %67 : vector<6x128xf32>
    %69 = arith.addf %64, %68 : vector<6x128xf32>
    %70 = vector.extract_strided_slice %15 {offsets = [0, 11], sizes = [6, 1], strides = [1, 1]} : vector<6x16xf32> to vector<6x1xf32>
    %71 = vector.broadcast %70 : vector<6x1xf32> to vector<6x128xf32>
    %72 = vector.broadcast %11 : vector<1x128xf32> to vector<6x128xf32>
    %73 = arith.mulf %71, %72 : vector<6x128xf32>
    %74 = arith.addf %69, %73 : vector<6x128xf32>
    %75 = vector.extract_strided_slice %15 {offsets = [0, 12], sizes = [6, 1], strides = [1, 1]} : vector<6x16xf32> to vector<6x1xf32>
    %76 = vector.broadcast %75 : vector<6x1xf32> to vector<6x128xf32>
    %77 = vector.broadcast %12 : vector<1x128xf32> to vector<6x128xf32>
    %78 = arith.mulf %76, %77 : vector<6x128xf32>
    %79 = arith.addf %74, %78 : vector<6x128xf32>
    %80 = vector.extract_strided_slice %15 {offsets = [0, 13], sizes = [6, 1], strides = [1, 1]} : vector<6x16xf32> to vector<6x1xf32>
    %81 = vector.broadcast %80 : vector<6x1xf32> to vector<6x128xf32>
    %82 = vector.broadcast %13 : vector<1x128xf32> to vector<6x128xf32>
    %83 = arith.mulf %81, %82 : vector<6x128xf32>
    %84 = arith.addf %79, %83 : vector<6x128xf32>
    %85 = vector.extract_strided_slice %15 {offsets = [0, 14], sizes = [6, 1], strides = [1, 1]} : vector<6x16xf32> to vector<6x1xf32>
    %86 = vector.broadcast %85 : vector<6x1xf32> to vector<6x128xf32>
    %87 = vector.broadcast %14 : vector<1x128xf32> to vector<6x128xf32>
    %88 = arith.mulf %86, %87 : vector<6x128xf32>
    %89 = arith.addf %84, %88 : vector<6x128xf32>
    %90 = vector.extract_strided_slice %15 {offsets = [0, 15], sizes = [6, 1], strides = [1, 1]} : vector<6x16xf32> to vector<6x1xf32>
    %91 = vector.broadcast %90 : vector<6x1xf32> to vector<6x128xf32>
    %92 = arith.addf %89, %91 : vector<6x128xf32>
    %cst = arith.constant 0.000000e+00 : f32
    %93 = vector.broadcast %cst : f32 to vector<6x128xf32>
    %94 = arith.maximumf %92, %93 : vector<6x128xf32>
    %c8_22 = arith.constant 8 : index
    %c0_23 = arith.constant 0 : index
    %95 = vector.load %arg5[%c8_22, %c0_23] : memref<56x16xf32, #tpu.memory_space<vmem>>, vector<8x16xf32>
    %96 = vector.extract_strided_slice %94 {offsets = [0, 0], sizes = [1, 128], strides = [1, 1]} : vector<6x128xf32> to vector<1x128xf32>
    %97 = vector.extract_strided_slice %94 {offsets = [1, 0], sizes = [1, 128], strides = [1, 1]} : vector<6x128xf32> to vector<1x128xf32>
    %98 = vector.extract_strided_slice %94 {offsets = [2, 0], sizes = [1, 128], strides = [1, 1]} : vector<6x128xf32> to vector<1x128xf32>
    %99 = vector.extract_strided_slice %94 {offsets = [3, 0], sizes = [1, 128], strides = [1, 1]} : vector<6x128xf32> to vector<1x128xf32>
    %100 = vector.extract_strided_slice %94 {offsets = [4, 0], sizes = [1, 128], strides = [1, 1]} : vector<6x128xf32> to vector<1x128xf32>
    %101 = vector.extract_strided_slice %94 {offsets = [5, 0], sizes = [1, 128], strides = [1, 1]} : vector<6x128xf32> to vector<1x128xf32>
    %102 = vector.extract_strided_slice %95 {offsets = [0, 0], sizes = [8, 1], strides = [1, 1]} : vector<8x16xf32> to vector<8x1xf32>
    %103 = vector.broadcast %102 : vector<8x1xf32> to vector<8x128xf32>
    %104 = vector.broadcast %96 : vector<1x128xf32> to vector<8x128xf32>
    %105 = arith.mulf %103, %104 : vector<8x128xf32>
    %106 = vector.extract_strided_slice %95 {offsets = [0, 1], sizes = [8, 1], strides = [1, 1]} : vector<8x16xf32> to vector<8x1xf32>
    %107 = vector.broadcast %106 : vector<8x1xf32> to vector<8x128xf32>
    %108 = vector.broadcast %97 : vector<1x128xf32> to vector<8x128xf32>
    %109 = arith.mulf %107, %108 : vector<8x128xf32>
    %110 = arith.addf %105, %109 : vector<8x128xf32>
    %111 = vector.extract_strided_slice %95 {offsets = [0, 2], sizes = [8, 1], strides = [1, 1]} : vector<8x16xf32> to vector<8x1xf32>
    %112 = vector.broadcast %111 : vector<8x1xf32> to vector<8x128xf32>
    %113 = vector.broadcast %98 : vector<1x128xf32> to vector<8x128xf32>
    %114 = arith.mulf %112, %113 : vector<8x128xf32>
    %115 = arith.addf %110, %114 : vector<8x128xf32>
    %116 = vector.extract_strided_slice %95 {offsets = [0, 3], sizes = [8, 1], strides = [1, 1]} : vector<8x16xf32> to vector<8x1xf32>
    %117 = vector.broadcast %116 : vector<8x1xf32> to vector<8x128xf32>
    %118 = vector.broadcast %99 : vector<1x128xf32> to vector<8x128xf32>
    %119 = arith.mulf %117, %118 : vector<8x128xf32>
    %120 = arith.addf %115, %119 : vector<8x128xf32>
    %121 = vector.extract_strided_slice %95 {offsets = [0, 4], sizes = [8, 1], strides = [1, 1]} : vector<8x16xf32> to vector<8x1xf32>
    %122 = vector.broadcast %121 : vector<8x1xf32> to vector<8x128xf32>
    %123 = vector.broadcast %100 : vector<1x128xf32> to vector<8x128xf32>
    %124 = arith.mulf %122, %123 : vector<8x128xf32>
    %125 = arith.addf %120, %124 : vector<8x128xf32>
    %126 = vector.extract_strided_slice %95 {offsets = [0, 5], sizes = [8, 1], strides = [1, 1]} : vector<8x16xf32> to vector<8x1xf32>
    %127 = vector.broadcast %126 : vector<8x1xf32> to vector<8x128xf32>
    %128 = vector.broadcast %101 : vector<1x128xf32> to vector<8x128xf32>
    %129 = arith.mulf %127, %128 : vector<8x128xf32>
    %130 = arith.addf %125, %129 : vector<8x128xf32>
    %131 = vector.extract_strided_slice %95 {offsets = [0, 6], sizes = [8, 1], strides = [1, 1]} : vector<8x16xf32> to vector<8x1xf32>
    %132 = vector.broadcast %131 : vector<8x1xf32> to vector<8x128xf32>
    %133 = arith.addf %130, %132 : vector<8x128xf32>
    %134 = vector.extract_strided_slice %133 {offsets = [0, 0], sizes = [4, 128], strides = [1, 1]} : vector<8x128xf32> to vector<4x128xf32>
    %135 = vector.extract_strided_slice %133 {offsets = [4, 0], sizes = [4, 128], strides = [1, 1]} : vector<8x128xf32> to vector<4x128xf32>
    %c16 = arith.constant 16 : index
    %c0_24 = arith.constant 0 : index
    %136 = vector.load %arg5[%c16, %c0_24] : memref<56x16xf32, #tpu.memory_space<vmem>>, vector<6x16xf32>
    %137 = vector.extract_strided_slice %136 {offsets = [0, 0], sizes = [6, 1], strides = [1, 1]} : vector<6x16xf32> to vector<6x1xf32>
    %138 = vector.broadcast %137 : vector<6x1xf32> to vector<6x128xf32>
    %139 = vector.broadcast %10 : vector<1x128xf32> to vector<6x128xf32>
    %140 = arith.mulf %138, %139 : vector<6x128xf32>
    %141 = vector.extract_strided_slice %136 {offsets = [0, 1], sizes = [6, 1], strides = [1, 1]} : vector<6x16xf32> to vector<6x1xf32>
    %142 = vector.broadcast %141 : vector<6x1xf32> to vector<6x128xf32>
    %143 = vector.broadcast %11 : vector<1x128xf32> to vector<6x128xf32>
    %144 = arith.mulf %142, %143 : vector<6x128xf32>
    %145 = arith.addf %140, %144 : vector<6x128xf32>
    %146 = vector.extract_strided_slice %136 {offsets = [0, 2], sizes = [6, 1], strides = [1, 1]} : vector<6x16xf32> to vector<6x1xf32>
    %147 = vector.broadcast %146 : vector<6x1xf32> to vector<6x128xf32>
    %148 = vector.broadcast %12 : vector<1x128xf32> to vector<6x128xf32>
    %149 = arith.mulf %147, %148 : vector<6x128xf32>
    %150 = arith.addf %145, %149 : vector<6x128xf32>
    %151 = vector.extract_strided_slice %136 {offsets = [0, 3], sizes = [6, 1], strides = [1, 1]} : vector<6x16xf32> to vector<6x1xf32>
    %152 = vector.broadcast %151 : vector<6x1xf32> to vector<6x128xf32>
    %153 = vector.broadcast %13 : vector<1x128xf32> to vector<6x128xf32>
    %154 = arith.mulf %152, %153 : vector<6x128xf32>
    %155 = arith.addf %150, %154 : vector<6x128xf32>
    %156 = vector.extract_strided_slice %136 {offsets = [0, 4], sizes = [6, 1], strides = [1, 1]} : vector<6x16xf32> to vector<6x1xf32>
    %157 = vector.broadcast %156 : vector<6x1xf32> to vector<6x128xf32>
    %158 = vector.broadcast %14 : vector<1x128xf32> to vector<6x128xf32>
    %159 = arith.mulf %157, %158 : vector<6x128xf32>
    %160 = arith.addf %155, %159 : vector<6x128xf32>
    %161 = vector.extract_strided_slice %136 {offsets = [0, 5], sizes = [6, 1], strides = [1, 1]} : vector<6x16xf32> to vector<6x1xf32>
    %162 = vector.broadcast %161 : vector<6x1xf32> to vector<6x128xf32>
    %163 = arith.addf %160, %162 : vector<6x128xf32>
    %cst_25 = arith.constant 0.000000e+00 : f32
    %164 = vector.broadcast %cst_25 : f32 to vector<6x128xf32>
    %165 = arith.maximumf %163, %164 : vector<6x128xf32>
    %c24 = arith.constant 24 : index
    %c0_26 = arith.constant 0 : index
    %166 = vector.load %arg5[%c24, %c0_26] : memref<56x16xf32, #tpu.memory_space<vmem>>, vector<8x16xf32>
    %167 = vector.extract_strided_slice %165 {offsets = [0, 0], sizes = [1, 128], strides = [1, 1]} : vector<6x128xf32> to vector<1x128xf32>
    %168 = vector.extract_strided_slice %165 {offsets = [1, 0], sizes = [1, 128], strides = [1, 1]} : vector<6x128xf32> to vector<1x128xf32>
    %169 = vector.extract_strided_slice %165 {offsets = [2, 0], sizes = [1, 128], strides = [1, 1]} : vector<6x128xf32> to vector<1x128xf32>
    %170 = vector.extract_strided_slice %165 {offsets = [3, 0], sizes = [1, 128], strides = [1, 1]} : vector<6x128xf32> to vector<1x128xf32>
    %171 = vector.extract_strided_slice %165 {offsets = [4, 0], sizes = [1, 128], strides = [1, 1]} : vector<6x128xf32> to vector<1x128xf32>
    %172 = vector.extract_strided_slice %165 {offsets = [5, 0], sizes = [1, 128], strides = [1, 1]} : vector<6x128xf32> to vector<1x128xf32>
    %173 = vector.extract_strided_slice %166 {offsets = [0, 0], sizes = [8, 1], strides = [1, 1]} : vector<8x16xf32> to vector<8x1xf32>
    %174 = vector.broadcast %173 : vector<8x1xf32> to vector<8x128xf32>
    %175 = vector.broadcast %167 : vector<1x128xf32> to vector<8x128xf32>
    %176 = arith.mulf %174, %175 : vector<8x128xf32>
    %177 = vector.extract_strided_slice %166 {offsets = [0, 1], sizes = [8, 1], strides = [1, 1]} : vector<8x16xf32> to vector<8x1xf32>
    %178 = vector.broadcast %177 : vector<8x1xf32> to vector<8x128xf32>
    %179 = vector.broadcast %168 : vector<1x128xf32> to vector<8x128xf32>
    %180 = arith.mulf %178, %179 : vector<8x128xf32>
    %181 = arith.addf %176, %180 : vector<8x128xf32>
    %182 = vector.extract_strided_slice %166 {offsets = [0, 2], sizes = [8, 1], strides = [1, 1]} : vector<8x16xf32> to vector<8x1xf32>
    %183 = vector.broadcast %182 : vector<8x1xf32> to vector<8x128xf32>
    %184 = vector.broadcast %169 : vector<1x128xf32> to vector<8x128xf32>
    %185 = arith.mulf %183, %184 : vector<8x128xf32>
    %186 = arith.addf %181, %185 : vector<8x128xf32>
    %187 = vector.extract_strided_slice %166 {offsets = [0, 3], sizes = [8, 1], strides = [1, 1]} : vector<8x16xf32> to vector<8x1xf32>
    %188 = vector.broadcast %187 : vector<8x1xf32> to vector<8x128xf32>
    %189 = vector.broadcast %170 : vector<1x128xf32> to vector<8x128xf32>
    %190 = arith.mulf %188, %189 : vector<8x128xf32>
    %191 = arith.addf %186, %190 : vector<8x128xf32>
    %192 = vector.extract_strided_slice %166 {offsets = [0, 4], sizes = [8, 1], strides = [1, 1]} : vector<8x16xf32> to vector<8x1xf32>
    %193 = vector.broadcast %192 : vector<8x1xf32> to vector<8x128xf32>
    %194 = vector.broadcast %171 : vector<1x128xf32> to vector<8x128xf32>
    %195 = arith.mulf %193, %194 : vector<8x128xf32>
    %196 = arith.addf %191, %195 : vector<8x128xf32>
    %197 = vector.extract_strided_slice %166 {offsets = [0, 5], sizes = [8, 1], strides = [1, 1]} : vector<8x16xf32> to vector<8x1xf32>
    %198 = vector.broadcast %197 : vector<8x1xf32> to vector<8x128xf32>
    %199 = vector.broadcast %172 : vector<1x128xf32> to vector<8x128xf32>
    %200 = arith.mulf %198, %199 : vector<8x128xf32>
    %201 = arith.addf %196, %200 : vector<8x128xf32>
    %202 = vector.extract_strided_slice %166 {offsets = [0, 6], sizes = [8, 1], strides = [1, 1]} : vector<8x16xf32> to vector<8x1xf32>
    %203 = vector.broadcast %202 : vector<8x1xf32> to vector<8x128xf32>
    %204 = arith.addf %201, %203 : vector<8x128xf32>
    %205 = math.exp %135 : vector<4x128xf32>
    %c0_27 = arith.constant 0 : index
    %c0_28 = arith.constant 0 : index
    %206 = vector.load %arg4[%c0_27, %c0_28] : memref<4x128xf32, #tpu.memory_space<vmem>>, vector<4x128xf32>
    %207 = arith.mulf %205, %206 : vector<4x128xf32>
    %208 = arith.addf %134, %207 : vector<4x128xf32>
    %c32 = arith.constant 32 : index
    %c0_29 = arith.constant 0 : index
    %209 = vector.load %arg5[%c32, %c0_29] : memref<56x16xf32, #tpu.memory_space<vmem>>, vector<6x16xf32>
    %210 = vector.extract_strided_slice %208 {offsets = [0, 0], sizes = [1, 128], strides = [1, 1]} : vector<4x128xf32> to vector<1x128xf32>
    %211 = vector.extract_strided_slice %208 {offsets = [1, 0], sizes = [1, 128], strides = [1, 1]} : vector<4x128xf32> to vector<1x128xf32>
    %212 = vector.extract_strided_slice %208 {offsets = [2, 0], sizes = [1, 128], strides = [1, 1]} : vector<4x128xf32> to vector<1x128xf32>
    %213 = vector.extract_strided_slice %208 {offsets = [3, 0], sizes = [1, 128], strides = [1, 1]} : vector<4x128xf32> to vector<1x128xf32>
    %214 = vector.extract_strided_slice %209 {offsets = [0, 0], sizes = [6, 1], strides = [1, 1]} : vector<6x16xf32> to vector<6x1xf32>
    %215 = vector.broadcast %214 : vector<6x1xf32> to vector<6x128xf32>
    %216 = vector.broadcast %210 : vector<1x128xf32> to vector<6x128xf32>
    %217 = arith.mulf %215, %216 : vector<6x128xf32>
    %218 = vector.extract_strided_slice %209 {offsets = [0, 1], sizes = [6, 1], strides = [1, 1]} : vector<6x16xf32> to vector<6x1xf32>
    %219 = vector.broadcast %218 : vector<6x1xf32> to vector<6x128xf32>
    %220 = vector.broadcast %211 : vector<1x128xf32> to vector<6x128xf32>
    %221 = arith.mulf %219, %220 : vector<6x128xf32>
    %222 = arith.addf %217, %221 : vector<6x128xf32>
    %223 = vector.extract_strided_slice %209 {offsets = [0, 2], sizes = [6, 1], strides = [1, 1]} : vector<6x16xf32> to vector<6x1xf32>
    %224 = vector.broadcast %223 : vector<6x1xf32> to vector<6x128xf32>
    %225 = vector.broadcast %212 : vector<1x128xf32> to vector<6x128xf32>
    %226 = arith.mulf %224, %225 : vector<6x128xf32>
    %227 = arith.addf %222, %226 : vector<6x128xf32>
    %228 = vector.extract_strided_slice %209 {offsets = [0, 3], sizes = [6, 1], strides = [1, 1]} : vector<6x16xf32> to vector<6x1xf32>
    %229 = vector.broadcast %228 : vector<6x1xf32> to vector<6x128xf32>
    %230 = vector.broadcast %213 : vector<1x128xf32> to vector<6x128xf32>
    %231 = arith.mulf %229, %230 : vector<6x128xf32>
    %232 = arith.addf %227, %231 : vector<6x128xf32>
    %233 = vector.extract_strided_slice %209 {offsets = [0, 4], sizes = [6, 1], strides = [1, 1]} : vector<6x16xf32> to vector<6x1xf32>
    %234 = vector.broadcast %233 : vector<6x1xf32> to vector<6x128xf32>
    %235 = arith.addf %232, %234 : vector<6x128xf32>
    %cst_30 = arith.constant 0.000000e+00 : f32
    %236 = vector.broadcast %cst_30 : f32 to vector<6x128xf32>
    %237 = arith.maximumf %235, %236 : vector<6x128xf32>
    %c40 = arith.constant 40 : index
    %c0_31 = arith.constant 0 : index
    %238 = vector.load %arg5[%c40, %c0_31] : memref<56x16xf32, #tpu.memory_space<vmem>>, vector<10x16xf32>
    %239 = vector.extract_strided_slice %237 {offsets = [0, 0], sizes = [1, 128], strides = [1, 1]} : vector<6x128xf32> to vector<1x128xf32>
    %240 = vector.extract_strided_slice %237 {offsets = [1, 0], sizes = [1, 128], strides = [1, 1]} : vector<6x128xf32> to vector<1x128xf32>
    %241 = vector.extract_strided_slice %237 {offsets = [2, 0], sizes = [1, 128], strides = [1, 1]} : vector<6x128xf32> to vector<1x128xf32>
    %242 = vector.extract_strided_slice %237 {offsets = [3, 0], sizes = [1, 128], strides = [1, 1]} : vector<6x128xf32> to vector<1x128xf32>
    %243 = vector.extract_strided_slice %237 {offsets = [4, 0], sizes = [1, 128], strides = [1, 1]} : vector<6x128xf32> to vector<1x128xf32>
    %244 = vector.extract_strided_slice %237 {offsets = [5, 0], sizes = [1, 128], strides = [1, 1]} : vector<6x128xf32> to vector<1x128xf32>
    %245 = vector.extract_strided_slice %238 {offsets = [0, 0], sizes = [10, 1], strides = [1, 1]} : vector<10x16xf32> to vector<10x1xf32>
    %246 = vector.broadcast %245 : vector<10x1xf32> to vector<10x128xf32>
    %247 = vector.broadcast %239 : vector<1x128xf32> to vector<10x128xf32>
    %248 = arith.mulf %246, %247 : vector<10x128xf32>
    %249 = vector.extract_strided_slice %238 {offsets = [0, 1], sizes = [10, 1], strides = [1, 1]} : vector<10x16xf32> to vector<10x1xf32>
    %250 = vector.broadcast %249 : vector<10x1xf32> to vector<10x128xf32>
    %251 = vector.broadcast %240 : vector<1x128xf32> to vector<10x128xf32>
    %252 = arith.mulf %250, %251 : vector<10x128xf32>
    %253 = arith.addf %248, %252 : vector<10x128xf32>
    %254 = vector.extract_strided_slice %238 {offsets = [0, 2], sizes = [10, 1], strides = [1, 1]} : vector<10x16xf32> to vector<10x1xf32>
    %255 = vector.broadcast %254 : vector<10x1xf32> to vector<10x128xf32>
    %256 = vector.broadcast %241 : vector<1x128xf32> to vector<10x128xf32>
    %257 = arith.mulf %255, %256 : vector<10x128xf32>
    %258 = arith.addf %253, %257 : vector<10x128xf32>
    %259 = vector.extract_strided_slice %238 {offsets = [0, 3], sizes = [10, 1], strides = [1, 1]} : vector<10x16xf32> to vector<10x1xf32>
    %260 = vector.broadcast %259 : vector<10x1xf32> to vector<10x128xf32>
    %261 = vector.broadcast %242 : vector<1x128xf32> to vector<10x128xf32>
    %262 = arith.mulf %260, %261 : vector<10x128xf32>
    %263 = arith.addf %258, %262 : vector<10x128xf32>
    %264 = vector.extract_strided_slice %238 {offsets = [0, 4], sizes = [10, 1], strides = [1, 1]} : vector<10x16xf32> to vector<10x1xf32>
    %265 = vector.broadcast %264 : vector<10x1xf32> to vector<10x128xf32>
    %266 = vector.broadcast %243 : vector<1x128xf32> to vector<10x128xf32>
    %267 = arith.mulf %265, %266 : vector<10x128xf32>
    %268 = arith.addf %263, %267 : vector<10x128xf32>
    %269 = vector.extract_strided_slice %238 {offsets = [0, 5], sizes = [10, 1], strides = [1, 1]} : vector<10x16xf32> to vector<10x1xf32>
    %270 = vector.broadcast %269 : vector<10x1xf32> to vector<10x128xf32>
    %271 = vector.broadcast %244 : vector<1x128xf32> to vector<10x128xf32>
    %272 = arith.mulf %270, %271 : vector<10x128xf32>
    %273 = arith.addf %268, %272 : vector<10x128xf32>
    %274 = vector.extract_strided_slice %238 {offsets = [0, 6], sizes = [10, 1], strides = [1, 1]} : vector<10x16xf32> to vector<10x1xf32>
    %275 = vector.broadcast %274 : vector<10x1xf32> to vector<10x128xf32>
    %276 = arith.addf %273, %275 : vector<10x128xf32>
    %c0_32 = arith.constant 0 : index
    %c0_33 = arith.constant 0 : index
    %277 = vector.load %arg6[%c0_32, %c0_33] : memref<4x128xf32, #tpu.memory_space<vmem>>, vector<4x128xf32>
    tpu.vector_store %arg6[%c0_32, %c0_33], %134 {strides = array<i32>} : memref<4x128xf32, #tpu.memory_space<vmem>>, vector<4x128xf32>,
    %c0_34 = arith.constant 0 : index
    %c0_35 = arith.constant 0 : index
    %278 = vector.load %arg7[%c0_34, %c0_35] : memref<4x128xf32, #tpu.memory_space<vmem>>, vector<4x128xf32>
    tpu.vector_store %arg7[%c0_34, %c0_35], %135 {strides = array<i32>} : memref<4x128xf32, #tpu.memory_space<vmem>>, vector<4x128xf32>,
    %279 = vector.extract_strided_slice %204 {offsets = [0, 0], sizes = [4, 128], strides = [1, 1]} : vector<8x128xf32> to vector<4x128xf32>
    %c0_36 = arith.constant 0 : index
    %c0_37 = arith.constant 0 : index
    %280 = vector.load %arg8[%c0_36, %c0_37] : memref<4x128xf32, #tpu.memory_space<vmem>>, vector<4x128xf32>
    tpu.vector_store %arg8[%c0_36, %c0_37], %279 {strides = array<i32>} : memref<4x128xf32, #tpu.memory_space<vmem>>, vector<4x128xf32>,
    %281 = vector.extract_strided_slice %204 {offsets = [4, 0], sizes = [4, 128], strides = [1, 1]} : vector<8x128xf32> to vector<4x128xf32>
    %c0_38 = arith.constant 0 : index
    %c0_39 = arith.constant 0 : index
    %282 = vector.load %arg9[%c0_38, %c0_39] : memref<4x128xf32, #tpu.memory_space<vmem>>, vector<4x128xf32>
    tpu.vector_store %arg9[%c0_38, %c0_39], %281 {strides = array<i32>} : memref<4x128xf32, #tpu.memory_space<vmem>>, vector<4x128xf32>,
    %c0_40 = arith.constant 0 : index
    %c0_41 = arith.constant 0 : index
    %283 = vector.load %arg10[%c0_40, %c0_41] : memref<4x128xf32, #tpu.memory_space<vmem>>, vector<4x128xf32>
    tpu.vector_store %arg10[%c0_40, %c0_41], %208 {strides = array<i32>} : memref<4x128xf32, #tpu.memory_space<vmem>>, vector<4x128xf32>,
    %c0_42 = arith.constant 0 : index
    %c0_43 = arith.constant 0 : index
    %284 = vector.load %arg11[%c0_42, %c0_43] : memref<10x128xf32, #tpu.memory_space<vmem>>, vector<10x128xf32>
    tpu.vector_store %arg11[%c0_42, %c0_43], %276 {strides = array<i32>} : memref<10x128xf32, #tpu.memory_space<vmem>>, vector<10x128xf32>,
    return
  }
  func.func @transform_0(%arg0: i32) -> (i32, i32) {
    %c0_i32 = arith.constant 0 : i32
    %c0_i32_0 = arith.constant 0 : i32
    return %c0_i32, %arg0 : i32, i32
  }
  func.func @transform_1(%arg0: i32) -> (i32, i32) {
    %c0_i32 = arith.constant 0 : i32
    %c0_i32_0 = arith.constant 0 : i32
    return %c0_i32, %arg0 : i32, i32
  }
  func.func @transform_2(%arg0: i32) -> (i32, i32) {
    %c0_i32 = arith.constant 0 : i32
    %c0_i32_0 = arith.constant 0 : i32
    return %c0_i32, %arg0 : i32, i32
  }
  func.func @transform_3(%arg0: i32) -> (i32, i32) {
    %c0_i32 = arith.constant 0 : i32
    %c0_i32_0 = arith.constant 0 : i32
    return %c0_i32, %arg0 : i32, i32
  }
  func.func @transform_4(%arg0: i32) -> (i32, i32) {
    %c0_i32 = arith.constant 0 : i32
    %c0_i32_0 = arith.constant 0 : i32
    %c0_i32_1 = arith.constant 0 : i32
    return %c0_i32, %c0_i32_0 : i32, i32
  }
  func.func @transform_5(%arg0: i32) -> (i32, i32) {
    %c0_i32 = arith.constant 0 : i32
    %c0_i32_0 = arith.constant 0 : i32
    return %c0_i32, %arg0 : i32, i32
  }
  func.func @transform_6(%arg0: i32) -> (i32, i32) {
    %c0_i32 = arith.constant 0 : i32
    %c0_i32_0 = arith.constant 0 : i32
    return %c0_i32, %arg0 : i32, i32
  }
  func.func @transform_7(%arg0: i32) -> (i32, i32) {
    %c0_i32 = arith.constant 0 : i32
    %c0_i32_0 = arith.constant 0 : i32
    return %c0_i32, %arg0 : i32, i32
  }
  func.func @transform_8(%arg0: i32) -> (i32, i32) {
    %c0_i32 = arith.constant 0 : i32
    %c0_i32_0 = arith.constant 0 : i32
    return %c0_i32, %arg0 : i32, i32
  }
  func.func @transform_9(%arg0: i32) -> (i32, i32) {
    %c0_i32 = arith.constant 0 : i32
    %c0_i32_0 = arith.constant 0 : i32
    return %c0_i32, %arg0 : i32, i32
  }
  func.func @transform_10(%arg0: i32) -> (i32, i32) {
    %c0_i32 = arith.constant 0 : i32
    %c0_i32_0 = arith.constant 0 : i32
    return %c0_i32, %arg0 : i32, i32
  }
}

</mosaic_0001>

<llo_original>
// kernel: tpu_custom_call.1
$region0: #{tpu_custom_call.1}
  #allocation0 [shape = 'u32[]', space=smem, size = 0x4, offset = 0x4, fixed_abs, tag = 'smem constant byte address 0x4 - core index']
  #allocation1 [shape = 'u32[144,128]{1,0:T(1,128)}', space=vmem, size = 0x12000, scoped, tag = 'internal scratch']
  %s0 = inlined_call_operand.vmem [shape: f32[10,128], index: 0, kind: input, shape index: {}]
  %s1 = inlined_call_operand.vmem [shape: f32[2,128], index: 1, kind: input, shape index: {}]
  %s2 = inlined_call_operand.vmem [shape: f32[3,128], index: 2, kind: input, shape index: {}]
  %s3 = inlined_call_operand.vmem [shape: f32[4,128], index: 3, kind: input, shape index: {}]
  %s4 = inlined_call_operand.vmem [shape: f32[56,16], index: 4, kind: input, shape index: {}]
  %s5 = inlined_call_operand.hbm [shape: f32[4,128], index: 5, kind: output, shape index: {0}]
  %s6 = inlined_call_operand.hbm [shape: f32[4,128], index: 6, kind: output, shape index: {1}]
  %s7 = inlined_call_operand.hbm [shape: f32[4,128], index: 7, kind: output, shape index: {2}]
  %s8 = inlined_call_operand.hbm [shape: f32[4,128], index: 8, kind: output, shape index: {3}]
  %s9 = inlined_call_operand.hbm [shape: f32[4,128], index: 9, kind: output, shape index: {4}]
  %s10 = inlined_call_operand.hbm [shape: f32[10,128], index: 10, kind: output, shape index: {5}]
  %11 = xla_tuple %s5, %s6, %s7, %s8, %s9, %s10
  %s12 = sld [smem:[#allocation0]]
  $region70: #{tpu_custom_call.1} parent=0
    _
  %s14 = ssub.s32 1, %s12
  %s15 = scalar_select 0, %s14, %s12
  $region1: #{tpu_custom_call.1} parent=0
    #allocation2 [shape = 'u8[2048]{0}', space=vmem, size = 0x800, scoped, tag = 'output window, operand 0, single buffered']
    #allocation3 [shape = 's32[1]{0}', space=sflag, size = 0x4, scoped, tag = 'scoped memory for tpu_custom_call.1']
    #allocation4 [shape = 'u8[2048]{0}', space=vmem, size = 0x800, scoped, tag = 'output window, operand 1, single buffered']
    #allocation5 [shape = 's32[1]{0}', space=sflag, size = 0x4, scoped, tag = 'scoped memory for tpu_custom_call.1']
    #allocation6 [shape = 'u8[2048]{0}', space=vmem, size = 0x800, scoped, tag = 'output window, operand 2, single buffered']
    #allocation7 [shape = 'u8[2048]{0}', space=vmem, size = 0x800, scoped, tag = 'output window, operand 3, single buffered']
    #allocation8 [shape = 's32[1]{0}', space=sflag, size = 0x4, scoped, tag = 'scoped memory for tpu_custom_call.1']
    #allocation9 [shape = 'u8[2048]{0}', space=vmem, size = 0x800, scoped, tag = 'output window, operand 4, single buffered']
    #allocation10 [shape = 'u8[8192]{0}', space=vmem, size = 0x2000, scoped, tag = 'output window, operand 5, single buffered']
    #allocation11 [shape = 's32[1]{0}', space=sflag, size = 0x4, scoped, tag = 'scoped memory for tpu_custom_call.1']
    %16 = vsyncpa [#allocation3], 0
    %17 = vsyncpa [#allocation5], 0
    %18 = vsyncpa [#allocation8], 0
    %19 = vsyncpa [#allocation11], 0
    // Predicated region
    $region2: #{tpu_custom_call.1} parent=1 // pred_check
      _
    $region3: #{tpu_custom_call.1} parent=1 // pred_check_branch
      %21 = sbr.rel (0) target = $region5
    $region4: #{tpu_custom_call.1} parent=1 // pred_region
      _
    $region5: #{tpu_custom_call.1} parent=1 // pred_fallthru
      _
    // Predicated region
    $region6: #{tpu_custom_call.1} parent=1 // pred_check
      _
    $region7: #{tpu_custom_call.1} parent=1 // pred_check_branch
      %23 = sbr.rel (0) target = $region9
    $region8: #{tpu_custom_call.1} parent=1 // pred_region
      _
    $region9: #{tpu_custom_call.1} parent=1 // pred_fallthru
      _
    // Predicated region
    $region10: #{tpu_custom_call.1} parent=1 // pred_check
      _
    $region11: #{tpu_custom_call.1} parent=1 // pred_check_branch
      %25 = sbr.rel (0) target = $region13
    $region12: #{tpu_custom_call.1} parent=1 // pred_region
      _
    $region13: #{tpu_custom_call.1} parent=1 // pred_fallthru
      _
    // Predicated region
    $region14: #{tpu_custom_call.1} parent=1 // pred_check
      _
    $region15: #{tpu_custom_call.1} parent=1 // pred_check_branch
      %27 = sbr.rel (0) target = $region17
    $region16: #{tpu_custom_call.1} parent=1 // pred_region
      _
    $region17: #{tpu_custom_call.1} parent=1 // pred_fallthru
      _
    // Predicated region
    $region18: #{tpu_custom_call.1} parent=1 // pred_check
      _
    $region19: #{tpu_custom_call.1} parent=1 // pred_check_branch
      %29 = sbr.rel (0) target = $region21
    $region20: #{tpu_custom_call.1} parent=1 // pred_region
      _
    $region21: #{tpu_custom_call.1} parent=1 // pred_fallthru
      _
    %v30 = vld [vmem:[%s0] sm:$0x1]
    %v31 = vld [vmem:[%s0 + $0x1] sm:$0x1]
    %v32 = vld [vmem:[%s0 + $0x2] sm:$0x1]
    %v33 = vld [vmem:[%s0 + $0x3] sm:$0x1]
    %v34 = vld [vmem:[%s0 + $0x4] sm:$0x1]
    %v35 = vld [vmem:[%s0 + $0x5] sm:$0x1]
    %v36 = vld [vmem:[%s0 + $0x6] sm:$0x1]
    %v37 = vld [vmem:[%s0 + $0x7] sm:$0x1]
    %v38 = vld [vmem:[%s0 + $0x8] sm:$0x1]
    %v39 = vld [vmem:[%s0 + $0x9] sm:$0x1]
    %v40 = vld [vmem:[%s1] sm:$0x1]
    %v41 = vld [vmem:[%s1 + $0x1] sm:$0x1]
    %v42 = vld [vmem:[%s2] sm:$0x1]
    %v43 = vld [vmem:[%s2 + $0x1] sm:$0x1]
    %v44 = vld [vmem:[%s2 + $0x2] sm:$0x1]
    %v45 = vld [vmem:[%s4] sm:$0x3f]
    %47 = vset.pattern.permute.xlu0 0
    %48 = vperm.xlu0 %47, %v45
    %v49 = vpop.permute.xlu0 %48
    %v51 = vlaneseq
    %v52 = vshrl.u32 %v51, 7
    %v53 = vsub.s32 0, %v52
    %v54 = vrot.slane %v30, %v53
    %v55 = vmul.f32 %v49, %v54
    %56 = vset.pattern.permute.xlu0 1
    %57 = vperm.xlu0 %56, %v45
    %v58 = vpop.permute.xlu0 %57
    %v60 = vlaneseq
    %v61 = vshrl.u32 %v60, 7
    %v62 = vsub.s32 0, %v61
    %v63 = vrot.slane %v31, %v62
    %v64 = vmul.f32 %v58, %v63
    %v65 = vadd.f32 %v55, %v64
    %66 = vset.pattern.permute.xlu0 2
    %67 = vperm.xlu0 %66, %v45
    %v68 = vpop.permute.xlu0 %67
    %v70 = vlaneseq
    %v71 = vshrl.u32 %v70, 7
    %v72 = vsub.s32 0, %v71
    %v73 = vrot.slane %v32, %v72
    %v74 = vmul.f32 %v68, %v73
    %v75 = vadd.f32 %v65, %v74
    %76 = vset.pattern.permute.xlu0 3
    %77 = vperm.xlu0 %76, %v45
    %v78 = vpop.permute.xlu0 %77
    %v80 = vlaneseq
    %v81 = vshrl.u32 %v80, 7
    %v82 = vsub.s32 0, %v81
    %v83 = vrot.slane %v33, %v82
    %v84 = vmul.f32 %v78, %v83
    %v85 = vadd.f32 %v75, %v84
    %86 = vset.pattern.permute.xlu0 4
    %87 = vperm.xlu0 %86, %v45
    %v88 = vpop.permute.xlu0 %87
    %v90 = vlaneseq
    %v91 = vshrl.u32 %v90, 7
    %v92 = vsub.s32 0, %v91
    %v93 = vrot.slane %v34, %v92
    %v94 = vmul.f32 %v88, %v93
    %v95 = vadd.f32 %v85, %v94
    %96 = vset.pattern.permute.xlu0 5
    %97 = vperm.xlu0 %96, %v45
    %v98 = vpop.permute.xlu0 %97
    %v100 = vlaneseq
    %v101 = vshrl.u32 %v100, 7
    %v102 = vsub.s32 0, %v101
    %v103 = vrot.slane %v35, %v102
    %v104 = vmul.f32 %v98, %v103
    %v105 = vadd.f32 %v95, %v104
    %106 = vset.pattern.permute.xlu0 6
    %107 = vperm.xlu0 %106, %v45
    %v108 = vpop.permute.xlu0 %107
    %v110 = vlaneseq
    %v111 = vshrl.u32 %v110, 7
    %v112 = vsub.s32 0, %v111
    %v113 = vrot.slane %v36, %v112
    %v114 = vmul.f32 %v108, %v113
    %v115 = vadd.f32 %v105, %v114
    %116 = vset.pattern.permute.xlu0 7
    %117 = vperm.xlu0 %116, %v45
    %v118 = vpop.permute.xlu0 %117
    %v120 = vlaneseq
    %v121 = vshrl.u32 %v120, 7
    %v122 = vsub.s32 0, %v121
    %v123 = vrot.slane %v37, %v122
    %v124 = vmul.f32 %v118, %v123
    %v125 = vadd.f32 %v115, %v124
    %126 = vset.pattern.permute.xlu0 8
    %127 = vperm.xlu0 %126, %v45
    %v128 = vpop.permute.xlu0 %127
    %v130 = vlaneseq
    %v131 = vshrl.u32 %v130, 7
    %v132 = vsub.s32 0, %v131
    %v133 = vrot.slane %v38, %v132
    %v134 = vmul.f32 %v128, %v133
    %v135 = vadd.f32 %v125, %v134
    %136 = vset.pattern.permute.xlu0 9
    %137 = vperm.xlu0 %136, %v45
    %v138 = vpop.permute.xlu0 %137
    %v140 = vlaneseq
    %v141 = vshrl.u32 %v140, 7
    %v142 = vsub.s32 0, %v141
    %v143 = vrot.slane %v39, %v142
    %v144 = vmul.f32 %v138, %v143
    %v145 = vadd.f32 %v135, %v144
    %146 = vset.pattern.permute.xlu0 10
    %147 = vperm.xlu0 %146, %v45
    %v148 = vpop.permute.xlu0 %147
    %v150 = vlaneseq
    %v151 = vshrl.u32 %v150, 7
    %v152 = vsub.s32 0, %v151
    %v153 = vrot.slane %v40, %v152
    %v154 = vmul.f32 %v148, %v153
    %v155 = vadd.f32 %v145, %v154
    %156 = vset.pattern.permute.xlu0 11
    %157 = vperm.xlu0 %156, %v45
    %v158 = vpop.permute.xlu0 %157
    %v160 = vlaneseq
    %v161 = vshrl.u32 %v160, 7
    %v162 = vsub.s32 0, %v161
    %v163 = vrot.slane %v41, %v162
    %v164 = vmul.f32 %v158, %v163
    %v165 = vadd.f32 %v155, %v164
    %166 = vset.pattern.permute.xlu0 12
    %167 = vperm.xlu0 %166, %v45
    %v168 = vpop.permute.xlu0 %167
    %v170 = vlaneseq
    %v171 = vshrl.u32 %v170, 7
    %v172 = vsub.s32 0, %v171
    %v173 = vrot.slane %v42, %v172
    %v174 = vmul.f32 %v168, %v173
    %v175 = vadd.f32 %v165, %v174
    %176 = vset.pattern.permute.xlu0 13
    %177 = vperm.xlu0 %176, %v45
    %v178 = vpop.permute.xlu0 %177
    %v180 = vlaneseq
    %v181 = vshrl.u32 %v180, 7
    %v182 = vsub.s32 0, %v181
    %v183 = vrot.slane %v43, %v182
    %v184 = vmul.f32 %v178, %v183
    %v185 = vadd.f32 %v175, %v184
    %186 = vset.pattern.permute.xlu0 14
    %187 = vperm.xlu0 %186, %v45
    %v188 = vpop.permute.xlu0 %187
    %v190 = vlaneseq
    %v191 = vshrl.u32 %v190, 7
    %v192 = vsub.s32 0, %v191
    %v193 = vrot.slane %v44, %v192
    %v194 = vmul.f32 %v188, %v193
    %v195 = vadd.f32 %v185, %v194
    %196 = vset.pattern.permute.xlu0 15
    %197 = vperm.xlu0 %196, %v45
    %v198 = vpop.permute.xlu0 %197
    %v200 = vadd.f32 %v195, %v198
    %v201 = vmax.f32 %v200, 0.0
    %v202 = vld [vmem:[%s4 + $0x8] sm:$0xff]
    %204 = vset.pattern.permute.xlu0 0
    %205 = vperm.xlu0 %204, %v202
    %v206 = vpop.permute.xlu0 %205
    %v208 = vlaneseq
    %v209 = vshrl.u32 %v208, 7
    %v210 = vsub.s32 0, %v209
    %v211 = vrot.slane %v201, %v210
    %v212 = vmul.f32 %v206, %v211
    %213 = vset.pattern.permute.xlu0 1
    %214 = vperm.xlu0 %213, %v202
    %v215 = vpop.permute.xlu0 %214
    %v217 = vlaneseq
    %v218 = vshrl.u32 %v217, 7
    %v219 = vsub.s32 1, %v218
    %v220 = vrot.slane %v201, %v219
    %v221 = vmul.f32 %v215, %v220
    %v222 = vadd.f32 %v212, %v221
    %223 = vset.pattern.permute.xlu0 2
    %224 = vperm.xlu0 %223, %v202
    %v225 = vpop.permute.xlu0 %224
    %v227 = vlaneseq
    %v228 = vshrl.u32 %v227, 7
    %v229 = vsub.s32 2, %v228
    %v230 = vrot.slane %v201, %v229
    %v231 = vmul.f32 %v225, %v230
    %v232 = vadd.f32 %v222, %v231
    %233 = vset.pattern.permute.xlu0 3
    %234 = vperm.xlu0 %233, %v202
    %v235 = vpop.permute.xlu0 %234
    %v237 = vlaneseq
    %v238 = vshrl.u32 %v237, 7
    %v239 = vsub.s32 3, %v238
    %v240 = vrot.slane %v201, %v239
    %v241 = vmul.f32 %v235, %v240
    %v242 = vadd.f32 %v232, %v241
    %243 = vset.pattern.permute.xlu0 4
    %244 = vperm.xlu0 %243, %v202
    %v245 = vpop.permute.xlu0 %244
    %v247 = vlaneseq
    %v248 = vshrl.u32 %v247, 7
    %v249 = vsub.s32 4, %v248
    %v250 = vrot.slane %v201, %v249
    %v251 = vmul.f32 %v245, %v250
    %v252 = vadd.f32 %v242, %v251
    %253 = vset.pattern.permute.xlu0 5
    %254 = vperm.xlu0 %253, %v202
    %v255 = vpop.permute.xlu0 %254
    %v257 = vlaneseq
    %v258 = vshrl.u32 %v257, 7
    %v259 = vsub.s32 5, %v258
    %v260 = vrot.slane %v201, %v259
    %v261 = vmul.f32 %v255, %v260
    %v262 = vadd.f32 %v252, %v261
    %263 = vset.pattern.permute.xlu0 6
    %264 = vperm.xlu0 %263, %v202
    %v265 = vpop.permute.xlu0 %264
    %v267 = vadd.f32 %v262, %v265
    %v268 = vld [vmem:[%s4 + $0x10] sm:$0x3f]
    %270 = vset.pattern.permute.xlu0 0
    %271 = vperm.xlu0 %270, %v268
    %v272 = vpop.permute.xlu0 %271
    %v274 = vmul.f32 %v272, %v153
    %275 = vset.pattern.permute.xlu0 1
    %276 = vperm.xlu0 %275, %v268
    %v277 = vpop.permute.xlu0 %276
    %v279 = vmul.f32 %v277, %v163
    %v280 = vadd.f32 %v274, %v279
    %281 = vset.pattern.permute.xlu0 2
    %282 = vperm.xlu0 %281, %v268
    %v283 = vpop.permute.xlu0 %282
    %v285 = vmul.f32 %v283, %v173
    %v286 = vadd.f32 %v280, %v285
    %287 = vset.pattern.permute.xlu0 3
    %288 = vperm.xlu0 %287, %v268
    %v289 = vpop.permute.xlu0 %288
    %v291 = vmul.f32 %v289, %v183
    %v292 = vadd.f32 %v286, %v291
    %293 = vset.pattern.permute.xlu0 4
    %294 = vperm.xlu0 %293, %v268
    %v295 = vpop.permute.xlu0 %294
    %v297 = vmul.f32 %v295, %v193
    %v298 = vadd.f32 %v292, %v297
    %299 = vset.pattern.permute.xlu0 5
    %300 = vperm.xlu0 %299, %v268
    %v301 = vpop.permute.xlu0 %300
    %v303 = vadd.f32 %v298, %v301
    %v304 = vmax.f32 %v303, 0.0
    %v305 = vld [vmem:[%s4 + $0x18] sm:$0xff]
    %307 = vset.pattern.permute.xlu0 0
    %308 = vperm.xlu0 %307, %v305
    %v309 = vpop.permute.xlu0 %308
    %v311 = vlaneseq
    %v312 = vshrl.u32 %v311, 7
    %v313 = vsub.s32 0, %v312
    %v314 = vrot.slane %v304, %v313
    %v315 = vmul.f32 %v309, %v314
    %316 = vset.pattern.permute.xlu0 1
    %317 = vperm.xlu0 %316, %v305
    %v318 = vpop.permute.xlu0 %317
    %v320 = vlaneseq
    %v321 = vshrl.u32 %v320, 7
    %v322 = vsub.s32 1, %v321
    %v323 = vrot.slane %v304, %v322
    %v324 = vmul.f32 %v318, %v323
    %v325 = vadd.f32 %v315, %v324
    %326 = vset.pattern.permute.xlu0 2
    %327 = vperm.xlu0 %326, %v305
    %v328 = vpop.permute.xlu0 %327
    %v330 = vlaneseq
    %v331 = vshrl.u32 %v330, 7
    %v332 = vsub.s32 2, %v331
    %v333 = vrot.slane %v304, %v332
    %v334 = vmul.f32 %v328, %v333
    %v335 = vadd.f32 %v325, %v334
    %336 = vset.pattern.permute.xlu0 3
    %337 = vperm.xlu0 %336, %v305
    %v338 = vpop.permute.xlu0 %337
    %v340 = vlaneseq
    %v341 = vshrl.u32 %v340, 7
    %v342 = vsub.s32 3, %v341
    %v343 = vrot.slane %v304, %v342
    %v344 = vmul.f32 %v338, %v343
    %v345 = vadd.f32 %v335, %v344
    %346 = vset.pattern.permute.xlu0 4
    %347 = vperm.xlu0 %346, %v305
    %v348 = vpop.permute.xlu0 %347
    %v350 = vlaneseq
    %v351 = vshrl.u32 %v350, 7
    %v352 = vsub.s32 4, %v351
    %v353 = vrot.slane %v304, %v352
    %v354 = vmul.f32 %v348, %v353
    %v355 = vadd.f32 %v345, %v354
    %356 = vset.pattern.permute.xlu0 5
    %357 = vperm.xlu0 %356, %v305
    %v358 = vpop.permute.xlu0 %357
    %v360 = vlaneseq
    %v361 = vshrl.u32 %v360, 7
    %v362 = vsub.s32 5, %v361
    %v363 = vrot.slane %v304, %v362
    %v364 = vmul.f32 %v358, %v363
    %v365 = vadd.f32 %v355, %v364
    %366 = vset.pattern.permute.xlu0 6
    %367 = vperm.xlu0 %366, %v305
    %v368 = vpop.permute.xlu0 %367
    %v370 = vadd.f32 %v365, %v368
    %v371 = vmul.f32 %v267, 1.442695
    %v372 = vpow.pop %v371
    %v373 = vld [vmem:[%s3] sm:$0xf]
    %v375 = vrot.slane %v373, 4
    %v377 = vmul.f32 %v372, %v375
    %v379 = vrot.slane %v377, 4
    %v381 = vadd.f32 %v267, %v379
    %v382 = vld [vmem:[%s4 + $0x20] sm:$0x3f]
    %384 = vset.pattern.permute.xlu0 0
    %385 = vperm.xlu0 %384, %v382
    %v386 = vpop.permute.xlu0 %385
    %v388 = vlaneseq
    %v389 = vshrl.u32 %v388, 7
    %v390 = vsub.s32 0, %v389
    %v391 = vrot.slane %v381, %v390
    %v392 = vmul.f32 %v386, %v391
    %393 = vset.pattern.permute.xlu0 1
    %394 = vperm.xlu0 %393, %v382
    %v395 = vpop.permute.xlu0 %394
    %v397 = vlaneseq
    %v398 = vshrl.u32 %v397, 7
    %v399 = vsub.s32 1, %v398
    %v400 = vrot.slane %v381, %v399
    %v401 = vmul.f32 %v395, %v400
    %v402 = vadd.f32 %v392, %v401
    %403 = vset.pattern.permute.xlu0 2
    %404 = vperm.xlu0 %403, %v382
    %v405 = vpop.permute.xlu0 %404
    %v407 = vlaneseq
    %v408 = vshrl.u32 %v407, 7
    %v409 = vsub.s32 2, %v408
    %v410 = vrot.slane %v381, %v409
    %v411 = vmul.f32 %v405, %v410
    %v412 = vadd.f32 %v402, %v411
    %413 = vset.pattern.permute.xlu0 3
    %414 = vperm.xlu0 %413, %v382
    %v415 = vpop.permute.xlu0 %414
    %v417 = vlaneseq
    %v418 = vshrl.u32 %v417, 7
    %v419 = vsub.s32 3, %v418
    %v420 = vrot.slane %v381, %v419
    %v421 = vmul.f32 %v415, %v420
    %v422 = vadd.f32 %v412, %v421
    %423 = vset.pattern.permute.xlu0 4
    %424 = vperm.xlu0 %423, %v382
    %v425 = vpop.permute.xlu0 %424
    %v427 = vadd.f32 %v422, %v425
    %v428 = vmax.f32 %v427, 0.0
    %v429 = vld [vmem:[%s4 + $0x28] sm:$0xff]
    %v430 = vld [vmem:[%s4 + $0x30] sm:$0x3]
    %432 = vset.pattern.permute.xlu0 0
    %433 = vperm.xlu0 %432, %v429
    %v434 = vpop.permute.xlu0 %433
    %437 = vset.pattern.permute.xlu0 0
    %438 = vperm.xlu0 %437, %v430
    %v439 = vpop.permute.xlu0 %438
    %v441 = vlaneseq
    %v442 = vshrl.u32 %v441, 7
    %v443 = vsub.s32 0, %v442
    %v444 = vrot.slane %v428, %v443
    %v445 = vmul.f32 %v434, %v444
    %v446 = vmul.f32 %v439, %v444
    %447 = vset.pattern.permute.xlu0 1
    %448 = vperm.xlu0 %447, %v429
    %v449 = vpop.permute.xlu0 %448
    %451 = vset.pattern.permute.xlu0 1
    %452 = vperm.xlu0 %451, %v430
    %v453 = vpop.permute.xlu0 %452
    %v455 = vlaneseq
    %v456 = vshrl.u32 %v455, 7
    %v457 = vsub.s32 1, %v456
    %v458 = vrot.slane %v428, %v457
    %v459 = vmul.f32 %v449, %v458
    %v460 = vmul.f32 %v453, %v458
    %v461 = vadd.f32 %v445, %v459
    %v462 = vadd.f32 %v446, %v460
    %463 = vset.pattern.permute.xlu0 2
    %464 = vperm.xlu0 %463, %v429
    %v465 = vpop.permute.xlu0 %464
    %467 = vset.pattern.permute.xlu0 2
    %468 = vperm.xlu0 %467, %v430
    %v469 = vpop.permute.xlu0 %468
    %v471 = vlaneseq
    %v472 = vshrl.u32 %v471, 7
    %v473 = vsub.s32 2, %v472
    %v474 = vrot.slane %v428, %v473
    %v475 = vmul.f32 %v465, %v474
    %v476 = vmul.f32 %v469, %v474
    %v477 = vadd.f32 %v461, %v475
    %v478 = vadd.f32 %v462, %v476
    %479 = vset.pattern.permute.xlu0 3
    %480 = vperm.xlu0 %479, %v429
    %v481 = vpop.permute.xlu0 %480
    %483 = vset.pattern.permute.xlu0 3
    %484 = vperm.xlu0 %483, %v430
    %v485 = vpop.permute.xlu0 %484
    %v487 = vlaneseq
    %v488 = vshrl.u32 %v487, 7
    %v489 = vsub.s32 3, %v488
    %v490 = vrot.slane %v428, %v489
    %v491 = vmul.f32 %v481, %v490
    %v492 = vmul.f32 %v485, %v490
    %v493 = vadd.f32 %v477, %v491
    %v494 = vadd.f32 %v478, %v492
    %495 = vset.pattern.permute.xlu0 4
    %496 = vperm.xlu0 %495, %v429
    %v497 = vpop.permute.xlu0 %496
    %499 = vset.pattern.permute.xlu0 4
    %500 = vperm.xlu0 %499, %v430
    %v501 = vpop.permute.xlu0 %500
    %v503 = vlaneseq
    %v504 = vshrl.u32 %v503, 7
    %v505 = vsub.s32 4, %v504
    %v506 = vrot.slane %v428, %v505
    %v507 = vmul.f32 %v497, %v506
    %v508 = vmul.f32 %v501, %v506
    %v509 = vadd.f32 %v493, %v507
    %v510 = vadd.f32 %v494, %v508
    %511 = vset.pattern.permute.xlu0 5
    %512 = vperm.xlu0 %511, %v429
    %v513 = vpop.permute.xlu0 %512
    %515 = vset.pattern.permute.xlu0 5
    %516 = vperm.xlu0 %515, %v430
    %v517 = vpop.permute.xlu0 %516
    %v519 = vlaneseq
    %v520 = vshrl.u32 %v519, 7
    %v521 = vsub.s32 5, %v520
    %v522 = vrot.slane %v428, %v521
    %v523 = vmul.f32 %v513, %v522
    %v524 = vmul.f32 %v517, %v522
    %v525 = vadd.f32 %v509, %v523
    %v526 = vadd.f32 %v510, %v524
    %527 = vset.pattern.permute.xlu0 6
    %528 = vperm.xlu0 %527, %v429
    %v529 = vpop.permute.xlu0 %528
    %531 = vset.pattern.permute.xlu0 6
    %532 = vperm.xlu0 %531, %v430
    %v533 = vpop.permute.xlu0 %532
    %v535 = vadd.f32 %v525, %v529
    %v536 = vadd.f32 %v526, %v533
    %537 = vst [vmem:[#allocation2] sm:$0xf] %v267
    %538 = vst [vmem:[#allocation4 - $0x4] sm:$0xf0] %v267
    %539 = vst [vmem:[#allocation6] sm:$0xf] %v370
    %540 = vst [vmem:[#allocation7 - $0x4] sm:$0xf0] %v370
    %541 = vst [vmem:[#allocation9] sm:$0xf] %v381
    %542 = vst [vmem:[#allocation10] sm:$0xff] %v535
    %543 = vst [vmem:[#allocation10 + $0x8] sm:$0x3] %v536
    // Predicated region
    $region22: #{tpu_custom_call.1} parent=1 // pred_check
      _
    $region23: #{tpu_custom_call.1} parent=1 // pred_check_branch
      %545 = sbr.rel (0) target = $region25
    $region24: #{tpu_custom_call.1} parent=1 // pred_region
      %s547 = ssub.s32 64, 64
      %548 = vsyncadd [#allocation3], %s547
      %s550 = sshll.u32 [#allocation2], 4
      %s551 = int_to_ptr.vmem [resolvable:$true] %s550
      %553 = dma.vmem_to_hbm [thread:$0]  %s551, 64, %s5, [#allocation3]
    $region25: #{tpu_custom_call.1} parent=1 // pred_fallthru
      _
    // Predicated region
    $region26: #{tpu_custom_call.1} parent=1 // pred_check
      _
    $region27: #{tpu_custom_call.1} parent=1 // pred_check_branch
      %555 = sbr.rel (0) target = $region29
    $region28: #{tpu_custom_call.1} parent=1 // pred_region
      %s557 = ssub.s32 64, 64
      %558 = vsyncadd [#allocation5], %s557
      %s560 = sshll.u32 [#allocation4], 4
      %s561 = int_to_ptr.vmem [resolvable:$true] %s560
      %563 = dma.vmem_to_hbm [thread:$0]  %s561, 64, %s6, [#allocation5]
    $region29: #{tpu_custom_call.1} parent=1 // pred_fallthru
      _
    // Predicated region
    $region30: #{tpu_custom_call.1} parent=1 // pred_check
      _
    $region31: #{tpu_custom_call.1} parent=1 // pred_check_branch
      %565 = sbr.rel (0) target = $region33
    $region32: #{tpu_custom_call.1} parent=1 // pred_region
      %s567 = ssub.s32 64, 64
      %568 = vsyncadd [#allocation5], %s567
      %s570 = sshll.u32 [#allocation6], 4
      %s571 = int_to_ptr.vmem [resolvable:$true] %s570
      %573 = dma.vmem_to_hbm [thread:$0]  %s571, 64, %s7, [#allocation5]
    $region33: #{tpu_custom_call.1} parent=1 // pred_fallthru
      _
    // Predicated region
    $region34: #{tpu_custom_call.1} parent=1 // pred_check
      _
    $region35: #{tpu_custom_call.1} parent=1 // pred_check_branch
      %575 = sbr.rel (0) target = $region37
    $region36: #{tpu_custom_call.1} parent=1 // pred_region
      %s577 = ssub.s32 64, 64
      %578 = vsyncadd [#allocation8], %s577
      %s580 = sshll.u32 [#allocation7], 4
      %s581 = int_to_ptr.vmem [resolvable:$true] %s580
      %583 = dma.vmem_to_hbm [thread:$0]  %s581, 64, %s8, [#allocation8]
    $region37: #{tpu_custom_call.1} parent=1 // pred_fallthru
      _
    // Predicated region
    $region38: #{tpu_custom_call.1} parent=1 // pred_check
      _
    $region39: #{tpu_custom_call.1} parent=1 // pred_check_branch
      %585 = sbr.rel (0) target = $region41
    $region40: #{tpu_custom_call.1} parent=1 // pred_region
      %s587 = ssub.s32 64, 64
      %588 = vsyncadd [#allocation8], %s587
      %s590 = sshll.u32 [#allocation9], 4
      %s591 = int_to_ptr.vmem [resolvable:$true] %s590
      %593 = dma.vmem_to_hbm [thread:$0]  %s591, 64, %s9, [#allocation8]
    $region41: #{tpu_custom_call.1} parent=1 // pred_fallthru
      _
    // Predicated region
    $region42: #{tpu_custom_call.1} parent=1 // pred_check
      _
    $region43: #{tpu_custom_call.1} parent=1 // pred_check_branch
      %595 = sbr.rel (0) target = $region45
    $region44: #{tpu_custom_call.1} parent=1 // pred_region
      %s597 = ssub.s32 256, 256
      %598 = vsyncadd [#allocation11], %s597
      %s599 = sshll.u32 [#allocation10], 4
      %s600 = int_to_ptr.vmem [resolvable:$true] %s599
      %605 = dma.vmem_to_hbm [thread:$0]  %s600, 256, %s10, [#allocation11], 128, 128, 8
    $region45: #{tpu_custom_call.1} parent=1 // pred_fallthru
      _
    // Predicated region
    $region46: #{tpu_custom_call.1} parent=1 // pred_check
      _
    $region47: #{tpu_custom_call.1} parent=1 // pred_check_branch
      %607 = sbr.rel (0) target = $region49
    $region48: #{tpu_custom_call.1} parent=1 // pred_region
      %608 = dma.done [#allocation3], 64
    $region49: #{tpu_custom_call.1} parent=1 // pred_fallthru
      _
    // Predicated region
    $region50: #{tpu_custom_call.1} parent=1 // pred_check
      _
    $region51: #{tpu_custom_call.1} parent=1 // pred_check_branch
      %610 = sbr.rel (0) target = $region53
    $region52: #{tpu_custom_call.1} parent=1 // pred_region
      %611 = dma.done [#allocation5], 64
    $region53: #{tpu_custom_call.1} parent=1 // pred_fallthru
      _
    // Predicated region
    $region54: #{tpu_custom_call.1} parent=1 // pred_check
      _
    $region55: #{tpu_custom_call.1} parent=1 // pred_check_branch
      %613 = sbr.rel (0) target = $region57
    $region56: #{tpu_custom_call.1} parent=1 // pred_region
      %614 = dma.done [#allocation5], 64
    $region57: #{tpu_custom_call.1} parent=1 // pred_fallthru
      _
    // Predicated region
    $region58: #{tpu_custom_call.1} parent=1 // pred_check
      _
    $region59: #{tpu_custom_call.1} parent=1 // pred_check_branch
      %616 = sbr.rel (0) target = $region61
    $region60: #{tpu_custom_call.1} parent=1 // pred_region
      %617 = dma.done [#allocation8], 64
    $region61: #{tpu_custom_call.1} parent=1 // pred_fallthru
      _
    // Predicated region
    $region62: #{tpu_custom_call.1} parent=1 // pred_check
      _
    $region63: #{tpu_custom_call.1} parent=1 // pred_check_branch
      %619 = sbr.rel (0) target = $region65
    $region64: #{tpu_custom_call.1} parent=1 // pred_region
      %620 = dma.done [#allocation8], 64
    $region65: #{tpu_custom_call.1} parent=1 // pred_fallthru
      _
    // Predicated region
    $region66: #{tpu_custom_call.1} parent=1 // pred_check
      _
    $region67: #{tpu_custom_call.1} parent=1 // pred_check_branch
      %622 = sbr.rel (0) target = $region69
    $region68: #{tpu_custom_call.1} parent=1 // pred_region
      %623 = dma.done [#allocation11], 256
    $region69: #{tpu_custom_call.1} parent=1 // pred_fallthru
      _
    %624 = vsyncpa [#allocation3], 1
    %625 = vsyncpa [#allocation5], 1
    %626 = vsyncpa [#allocation8], 1
    %627 = vsyncpa [#allocation11], 1

</llo_original>
